<compile_context>
chip_gen: v6e
topology: v6e:2x2x1
jax: 0.10.0
libtpu: 0.0.40
codegen_flags: <defaults>
</compile_context>

<pallas_src>
import jax
import jax.numpy as jnp
from jax.experimental import pallas as pl
from jax.experimental.pallas import tpu as pltpu


def _mylist_dense_kernel(x_ref, s_ref, o_ref):
    # x_ref : VMEM (TILE_R, 128)  row-major x; each row = 32 samples x 4 features
    # s_ref : VMEM (128, 32)      folded-weight selection matrix (grid-resident)
    # o_ref : VMEM (TILE_R, 32)   each row = 32 samples, row-major == sample order
    #
    # One MXU matmul does the 4-feature contraction and compacts the 4-lane
    # feature groups into dense sample order.  f32 operands -> full-precision
    # (multi-pass) MXU matmul with f32 accumulation.
    o_ref[...] = jnp.dot(
        x_ref[...].astype(jnp.float32),
        s_ref[...],
        preferred_element_type=jnp.float32,
    ).astype(o_ref.dtype)


def mylist_dense(x, w0, w1, w2, w3, *, tile_rows=4096):
    n, k = x.shape
    assert k == 4, "MylistDense expects 4 input features"

    # Fold the weight chain algebraically: (4,4)@(4,4)@(4,4)@(4,1) -> (4,)
    # (associative; differs from the chained form only by f32 rounding order).
    w = (w0 @ w1 @ w2 @ w3).reshape(4).astype(jnp.float32)

    # Row-major consumption: pad N to a multiple of 256 samples (at most 255
    # zero rows, a few KiB) so (N_pad, 4) reshapes freely (contiguous) to
    # (R, 128) with R a multiple of 8.
    spr = 128 // 4                       # samples per 128-lane row (= 32)
    n_pad = pl.cdiv(n, 8 * spr) * (8 * spr)
    if n_pad != n:
        x = jnp.pad(x, ((0, n_pad - n), (0, 0)))
    r = n_pad // spr
    x_rs = x.reshape(r, 128)             # free reshape, no HBM traffic

    # Selection/contraction matrix: S[4k + f, k] = w[f].
    lane = jnp.arange(128)
    col = jnp.arange(spr)
    sel = jnp.where(
        (lane[:, None] // 4) == col[None, :], w[lane % 4][:, None], 0.0
    ).astype(jnp.float32)

    # Tile selection:
    #   * >= ~2 MiB of input per step for large N (amortize per-step overhead),
    #   * >= ~8 grid steps for mid-sized N (v7x megacore + pipelining),
    #   * double-buffered VMEM footprint ~ tile_r * 2 KiB -> ~8.3 MiB at 4096,
    #     which fits v5e's 16 MiB default scoped VMEM (no limit override needed).
    tile_r = min(tile_rows, max(8, pl.cdiv(r, 8)))
    tile_r = pl.cdiv(tile_r, 8) * 8      # (8, 128) block-shape rule
    grid = (pl.cdiv(r, tile_r),)         # last block may be partial (masked)

    itemsize = jnp.dtype(x.dtype).itemsize
    out = pl.pallas_call(
        _mylist_dense_kernel,
        out_shape=jax.ShapeDtypeStruct((r, spr), x.dtype),
        grid=grid,
        in_specs=[
            # x tile: full 128-lane extent, tiled over rows.
            pl.BlockSpec((tile_r, 128), lambda i: (i, 0)),
            # Selection matrix: constant index map -> resident for all steps.
            pl.BlockSpec((128, spr), lambda i: (0, 0)),
        ],
        out_specs=pl.BlockSpec((tile_r, spr), lambda i: (i, 0)),
        compiler_params=pltpu.CompilerParams(
            dimension_semantics=("parallel",),
        ),
        cost_estimate=pl.CostEstimate(
            flops=2 * r * 128 * spr,
            transcendentals=0,
            bytes_accessed=(r * 128 + r * spr) * itemsize + 128 * spr * 4,
        ),
    )(x_rs, sel)

    # (R, 32) row-major is already sample order: free reshape, drop padding.
    return out.reshape(n_pad, 1)[:n]


def mylist_dense_ref(x, w0, w1, w2, w3):
    # Pure-JAX reference with the module's op order (chained matmuls), at
    # HIGHEST precision so the check isn't dominated by XLA's own rounding.
    hp = jax.lax.Precision.HIGHEST
    out = x
    for wi in (w0, w1, w2, w3):
        out = jnp.dot(out, wi, precision=hp)
    return out


if __name__ == "__main__":
    key = jax.random.PRNGKey(0)
    kx, k0, k1, k2, k3 = jax.random.split(key, 5)

    # Deterministic parameters (shapes from the module's __init__).
    w0 = jax.random.normal(k0, (4, 4), dtype=jnp.float32)
    w1 = jax.random.normal(k1, (4, 4), dtype=jnp.float32)
    w2 = jax.random.normal(k2, (4, 4), dtype=jnp.float32)
    w3 = jax.random.normal(k3, (4, 1), dtype=jnp.float32)

    # Small batch (8) plus a padded multi-grid-step case (1000).
    for n in (8, 1000):
        x = jax.random.normal(jax.random.fold_in(kx, n), (n, 4), dtype=jnp.float32)

        out = jax.block_until_ready(mylist_dense(x, w0, w1, w2, w3))
        ref = mylist_dense_ref(x, w0, w1, w2, w3)

        assert out.shape == (n, 1), out.shape
        # Tolerance covers the folded-weight reassociation + MXU rounding order.
        assert jnp.allclose(out, ref, atol=1e-3, rtol=1e-3), (
            n, float(jnp.max(jnp.abs(out - ref))))

    print("KERNEL_OK")
</pallas_src>

<mosaic_0001>
module attributes {stable_mosaic.version = 11 : i64} {
  func.func @_mylist_dense_kernel(%arg0: i32, %arg1: memref<8x128xf32, #tpu.memory_space<vmem>>, %arg2: memref<128x32xf32, #tpu.memory_space<vmem>>, %arg3: memref<8x32xf32, #tpu.memory_space<vmem>>) attributes {dimension_semantics = [#tpu.dimension_semantics<parallel>], iteration_bounds = array<i64: 1>, scalar_prefetch = 0 : i64, scratch_operands = 0 : i64, tpu.core_type = #tpu.core_type<tc>, window_params = [{transform_indices = @transform_0, window_bounds = array<i64: 8, 128>}, {pipeline_mode = #tpu.pipeline_mode<synchronous>, transform_indices = @transform_1, window_bounds = array<i64: 128, 32>}, {transform_indices = @transform_2, window_bounds = array<i64: 8, 32>}]} {
    %c0 = arith.constant 0 : index
    %c0_0 = arith.constant 0 : index
    %0 = vector.load %arg1[%c0, %c0_0] : memref<8x128xf32, #tpu.memory_space<vmem>>, vector<8x128xf32>
    %c0_1 = arith.constant 0 : index
    %c0_2 = arith.constant 0 : index
    %1 = vector.load %arg2[%c0_1, %c0_2] : memref<128x32xf32, #tpu.memory_space<vmem>>, vector<128x32xf32>
    %cst = arith.constant dense<0.000000e+00> : vector<8x32xf32>
    %2 = tpu.matmul %0, %1, %cst {dimension_numbers = #tpu.dot_dimension_numbers<[1], [0], [0], [1], [0, 0, 1, 1], [], []>} : vector<8x128xf32>, vector<128x32xf32>, vector<8x32xf32> -> vector<8x32xf32>
    %c0_3 = arith.constant 0 : index
    %c0_4 = arith.constant 0 : index
    %3 = vector.load %arg3[%c0_3, %c0_4] : memref<8x32xf32, #tpu.memory_space<vmem>>, vector<8x32xf32>
    tpu.vector_store %arg3[%c0_3, %c0_4], %2 {strides = array<i32>} : memref<8x32xf32, #tpu.memory_space<vmem>>, vector<8x32xf32>,
    return
  }
  func.func @transform_0(%arg0: i32) -> (i32, i32) {
    %c0_i32 = arith.constant 0 : i32
    %c0_i32_0 = arith.constant 0 : i32
    return %arg0, %c0_i32 : i32, i32
  }
  func.func @transform_1(%arg0: i32) -> (i32, i32) {
    %c0_i32 = arith.constant 0 : i32
    %c0_i32_0 = arith.constant 0 : i32
    %c0_i32_1 = arith.constant 0 : i32
    return %c0_i32, %c0_i32_0 : i32, i32
  }
  func.func @transform_2(%arg0: i32) -> (i32, i32) {
    %c0_i32 = arith.constant 0 : i32
    %c0_i32_0 = arith.constant 0 : i32
    return %arg0, %c0_i32 : i32, i32
  }
}

</mosaic_0001>

<llo_original>
// kernel: tpu_custom_call.1
$region0: #{tpu_custom_call.1}
  #allocation0 [shape = 'u32[]', space=smem, size = 0x4, offset = 0x4, fixed_abs, tag = 'smem constant byte address 0x4 - core index']
  #allocation1 [shape = 'u32[144,128]{1,0:T(1,128)}', space=vmem, size = 0x12000, scoped, tag = 'internal scratch']
  %s0 = inlined_call_operand.vmem [shape: f32[8,128], index: 0, kind: input, shape index: {}]
  %s1 = inlined_call_operand.vmem [shape: f32[128,32], index: 1, kind: input, shape index: {}]
  %s2 = inlined_call_operand.hbm [shape: f32[8,32], index: 2, kind: output, shape index: {}]
  %s3 = sld [smem:[#allocation0]]
  $region18: #{tpu_custom_call.1} parent=0
    _
  %s5 = ssub.s32 1, %s3
  %s6 = scalar_select 0, %s5, %s3
  $region1: #{tpu_custom_call.1} parent=0
    #allocation2 [shape = 'u8[4096]{0}', space=vmem, size = 0x1000, scoped, tag = 'output window, operand 0, single buffered']
    #allocation3 [shape = 's32[1]{0}', space=sflag, size = 0x4, scoped, tag = 'scoped memory for tpu_custom_call.1']
    %7 = vsyncpa [#allocation3], 0
    // Predicated region
    $region2: #{tpu_custom_call.1} parent=1 // pred_check
      _
    $region3: #{tpu_custom_call.1} parent=1 // pred_check_branch
      %9 = sbr.rel (0) target = $region5
    $region4: #{tpu_custom_call.1} parent=1 // pred_region
      _
    $region5: #{tpu_custom_call.1} parent=1 // pred_fallthru
      _
    // Predicated region
    $region6: #{tpu_custom_call.1} parent=1 // pred_check
      _
    $region7: #{tpu_custom_call.1} parent=1 // pred_check_branch
      %11 = sbr.rel (0) target = $region9
    $region8: #{tpu_custom_call.1} parent=1 // pred_region
      _
    $region9: #{tpu_custom_call.1} parent=1 // pred_fallthru
      _
    %v12 = vld [vmem:[%s0] sm:$0xff]
    %v13 = vld [vmem:[%s1] sm:$0xff]
    %v14 = vld [vmem:[%s1 + $0x8] sm:$0xff]
    %v15 = vld [vmem:[%s1 + $0x10] sm:$0xff]
    %v16 = vld [vmem:[%s1 + $0x18] sm:$0xff]
    %v17 = vld [vmem:[%s1 + $0x20] sm:$0xff]
    %v18 = vld [vmem:[%s1 + $0x28] sm:$0xff]
    %v19 = vld [vmem:[%s1 + $0x30] sm:$0xff]
    %v20 = vld [vmem:[%s1 + $0x38] sm:$0xff]
    %v21 = vld [vmem:[%s1 + $0x40] sm:$0xff]
    %v22 = vld [vmem:[%s1 + $0x48] sm:$0xff]
    %v23 = vld [vmem:[%s1 + $0x50] sm:$0xff]
    %v24 = vld [vmem:[%s1 + $0x58] sm:$0xff]
    %v25 = vld [vmem:[%s1 + $0x60] sm:$0xff]
    %v26 = vld [vmem:[%s1 + $0x68] sm:$0xff]
    %v27 = vld [vmem:[%s1 + $0x70] sm:$0xff]
    %v28 = vld [vmem:[%s1 + $0x78] sm:$0xff]
    %29 = vmatprep.subr.mxu0 0.0
    %30 = vmatpush1.msra.mxu0 %v28
    %31 = vmatprep.subr.mxu0 0.0
    %32 = vmatpush1.msra.mxu0 %v27
    %33 = vmatprep.subr.mxu0 0.0
    %34 = vmatpush1.msra.mxu0 %v26
    %35 = vmatprep.subr.mxu0 0.0
    %36 = vmatpush1.msra.mxu0 %v25
    %37 = vmatprep.subr.mxu0 0.0
    %38 = vmatpush1.msra.mxu0 %v24
    %39 = vmatprep.subr.mxu0 0.0
    %40 = vmatpush1.msra.mxu0 %v23
    %41 = vmatprep.subr.mxu0 0.0
    %42 = vmatpush1.msra.mxu0 %v22
    %43 = vmatprep.subr.mxu0 0.0
    %44 = vmatpush1.msra.mxu0 %v21
    %45 = vmatprep.subr.mxu0 0.0
    %46 = vmatpush1.msra.mxu0 %v20
    %47 = vmatprep.subr.mxu0 0.0
    %48 = vmatpush1.msra.mxu0 %v19
    %49 = vmatprep.subr.mxu0 0.0
    %50 = vmatpush1.msra.mxu0 %v18
    %51 = vmatprep.subr.mxu0 0.0
    %52 = vmatpush1.msra.mxu0 %v17
    %53 = vmatprep.subr.mxu0 0.0
    %54 = vmatpush1.msra.mxu0 %v16
    %55 = vmatprep.subr.mxu0 0.0
    %56 = vmatpush1.msra.mxu0 %v15
    %57 = vmatprep.subr.mxu0 0.0
    %58 = vmatpush1.msra.mxu0 %v14
    %59 = vmatprep.subr.mxu0 0.0
    %60 = vmatpush1.msra.mxu0 %v13
    %61 = vmatprep.subr.mxu0 0.0
    %62 = vmatpush2.msra.mxu0 0.0
    %63 = vmatprep.subr.mxu0 0.0
    %64 = vmatpush2.msra.mxu0 0.0
    %65 = vmatprep.subr.mxu0 0.0
    %66 = vmatpush2.msra.mxu0 0.0
    %67 = vmatprep.subr.mxu0 0.0
    %68 = vmatpush2.msra.mxu0 0.0
    %69 = vmatprep.subr.mxu0 0.0
    %70 = vmatpush2.msra.mxu0 0.0
    %71 = vmatprep.subr.mxu0 0.0
    %72 = vmatpush2.msra.mxu0 0.0
    %73 = vmatprep.subr.mxu0 0.0
    %74 = vmatpush2.msra.mxu0 0.0
    %75 = vmatprep.subr.mxu0 0.0
    %76 = vmatpush2.msra.mxu0 0.0
    %77 = vmatprep.subr.mxu0 0.0
    %78 = vmatpush2.msra.mxu0 0.0
    %79 = vmatprep.subr.mxu0 0.0
    %80 = vmatpush2.msra.mxu0 0.0
    %81 = vmatprep.subr.mxu0 0.0
    %82 = vmatpush2.msra.mxu0 0.0
    %83 = vmatprep.subr.mxu0 0.0
    %84 = vmatpush2.msra.mxu0 0.0
    %85 = vmatprep.subr.mxu0 0.0
    %86 = vmatpush2.msra.mxu0 0.0
    %87 = vmatprep.subr.mxu0 0.0
    %88 = vmatpush2.msra.mxu0 0.0
    %89 = vmatprep.subr.mxu0 0.0
    %90 = vmatpush2.msra.mxu0 0.0
    %91 = vmatprep.subr.mxu0 0.0
    %92 = vmatpush2.msra.mxu0 0.0
    %93 = vmatprep.mubr.f32.mxu0 0.0
    %94 = vmatmul.mubr.f32.gmra.mxu0 %v12
    %v95 = vpop.f32.mrf.mxu0
    %v96 = vadd.f32 0.0, %v95
    %v97 = vpop.f32.mrf.mxu0
    %98 = vdwg.mxu0
    %vm99 = vcmask 261120
    %100 = vst.msk [vmem:[#allocation2] sm:$0xff] %vm99, %v96
    // Predicated region
    $region10: #{tpu_custom_call.1} parent=1 // pred_check
      _
    $region11: #{tpu_custom_call.1} parent=1 // pred_check_branch
      %102 = sbr.rel (0) target = $region13
    $region12: #{tpu_custom_call.1} parent=1 // pred_region
      %s104 = ssub.s32 128, 128
      %105 = vsyncadd [#allocation3], %s104
      %s107 = sshll.u32 [#allocation2], 4
      %s108 = int_to_ptr.vmem [resolvable:$true] %s107
      %110 = dma.vmem_to_hbm [thread:$0]  %s108, 128, %s2, [#allocation3]
    $region13: #{tpu_custom_call.1} parent=1 // pred_fallthru
      _
    // Predicated region
    $region14: #{tpu_custom_call.1} parent=1 // pred_check
      _
    $region15: #{tpu_custom_call.1} parent=1 // pred_check_branch
      %112 = sbr.rel (0) target = $region17
    $region16: #{tpu_custom_call.1} parent=1 // pred_region
      %113 = dma.done [#allocation3], 128
    $region17: #{tpu_custom_call.1} parent=1 // pred_fallthru
      _
    %114 = vsyncpa [#allocation3], 1

</llo_original>
